<compile_context>
chip_gen: v6e
topology: v6e:2x2x1
jax: 0.10.0
libtpu: 0.0.40
codegen_flags: <defaults>
</compile_context>

<pallas_src>
import functools

import jax
import jax.numpy as jnp
from jax.experimental import pallas as pl
from jax.experimental.pallas import tpu as pltpu


# ----------------------------------------------------------------------------
# Tiled matmul kernel (bf16 operands on the MXU, f32 accumulation).
# Used for in_process and every per-layer fc.
# ----------------------------------------------------------------------------
def _matmul_kernel(x_ref, w_ref, o_ref, acc_ref):
    @pl.when(pl.program_id(2) == 0)
    def _init():
        acc_ref[...] = jnp.zeros_like(acc_ref)

    acc_ref[...] += jnp.dot(
        x_ref[...].astype(jnp.bfloat16),
        w_ref[...].astype(jnp.bfloat16),
        preferred_element_type=jnp.float32)

    @pl.when(pl.program_id(2) == pl.num_programs(2) - 1)
    def _finalize():
        o_ref[...] = acc_ref[...].astype(o_ref.dtype)


def _pick_tile(dim, target):
    if dim <= target:
        return dim                       # block == full dim is always legal
    assert dim % target == 0, f"dim {dim} not divisible by tile {target}"
    return target


def matmul(x, w, *, out_dtype=jnp.float32, tm=256, tn=256, tk=512):
    m, k = x.shape
    k2, n = w.shape
    assert k == k2
    tm = _pick_tile(m, tm)
    tn = _pick_tile(n, tn)
    tk = _pick_tile(k, tk)
    return pl.pallas_call(
        _matmul_kernel,
        out_shape=jax.ShapeDtypeStruct((m, n), out_dtype),
        grid_spec=pltpu.PrefetchScalarGridSpec(
            num_scalar_prefetch=0,
            grid=(m // tm, n // tn, k // tk),
            in_specs=[
                pl.BlockSpec((tm, tk), lambda i, j, kk: (i, kk)),
                pl.BlockSpec((tk, tn), lambda i, j, kk: (kk, j)),
            ],
            out_specs=pl.BlockSpec((tm, tn), lambda i, j, kk: (i, j)),
            scratch_shapes=[pltpu.VMEM((tm, tn), jnp.float32)],
        ),
        compiler_params=pltpu.CompilerParams(
            dimension_semantics=("parallel", "parallel", "arbitrary"),
            vmem_limit_bytes=48 * 1024 * 1024),
    )(x, w)


# ----------------------------------------------------------------------------
# Flash-style GAT attention kernel.
#
# grid = (qi, kj):
#   er_ref  : (Tq, H)      dst-side score term  a_r · z_i   (f32)
#   el_ref  : (H, Tk)      src-side score term  a_l · z_j   (f32)
#   adj_ref : (Tq, Tk)     int8 adjacency tile, adj[dst, src] > 0 iff edge
#   zk_ref  : (Tk, H*F)    projected features (src rows), bf16
#   out_ref : (Tq, H*F)    or (Tq, F) when mean_heads=True
# scratch (persist across kj, re-initialized at kj == 0):
#   m_ref   : (H, Tq, 1)   running row max
#   l_ref   : (H, Tq, 1)   running softmax denominator
#   acc_ref : (H, Tq, F)   running (un-normalized) PV accumulator (f32)
# ----------------------------------------------------------------------------
def _gat_flash_kernel(er_ref, el_ref, adj_ref, zk_ref, out_ref,
                      m_ref, l_ref, acc_ref, *,
                      num_heads, out_feats, negative_slope, use_elu,
                      mean_heads):
    kj = pl.program_id(1)
    nk = pl.num_programs(1)
    H, F = num_heads, out_feats
    tq = acc_ref.shape[1]
    neg_big = -1e30  # finite "minus infinity": avoids inf-inf NaN in exp()

    @pl.when(kj == 0)
    def _init():
        m_ref[...] = jnp.full(m_ref.shape, neg_big, dtype=m_ref.dtype)
        l_ref[...] = jnp.zeros_like(l_ref)
        acc_ref[...] = jnp.zeros_like(acc_ref)

    er = er_ref[...].astype(jnp.float32)          # (Tq, H) — hoisted dst term
    el = el_ref[...].astype(jnp.float32)          # (H, Tk)
    edge = adj_ref[...] > 0                       # (Tq, Tk), shared by heads
    zk = zk_ref[...]                              # (Tk, H*F) bf16

    for h in range(H):
        e = er[:, h:h + 1] + el[h:h + 1, :]                   # (Tq, Tk)
        e = jnp.where(e > 0, e, negative_slope * e)           # LeakyReLU
        e = jnp.where(edge, e, neg_big)                       # mask non-edges

        m_prev = m_ref[h]                                     # (Tq, 1)
        m_new = jnp.maximum(m_prev, jnp.max(e, axis=-1, keepdims=True))
        corr = jnp.exp(m_prev - m_new)
        p = jnp.exp(e - m_new)                                # (Tq, Tk) f32

        l_ref[h] = corr * l_ref[h] + jnp.sum(p, axis=-1, keepdims=True)
        pv = jnp.dot(p.astype(jnp.bfloat16), zk[:, h * F:(h + 1) * F],
                     preferred_element_type=jnp.float32)      # (Tq, F)
        acc_ref[h] = corr * acc_ref[h] + pv
        m_ref[h] = m_new

    @pl.when(kj == nk - 1)
    def _finalize():
        if mean_heads:
            total = jnp.zeros((tq, F), jnp.float32)
            for h in range(H):
                total = total + acc_ref[h] * pl.reciprocal(l_ref[h],
                                                           approx=True)
            out_ref[...] = (total * (1.0 / H)).astype(out_ref.dtype)
        else:
            for h in range(H):
                o = acc_ref[h] * pl.reciprocal(l_ref[h], approx=True)
                if use_elu:
                    # overflow-safe ELU
                    o = jnp.where(o > 0, o, jnp.expm1(jnp.minimum(o, 0.0)))
                out_ref[:, h * F:(h + 1) * F] = o.astype(out_ref.dtype)


def gat_attention(z, er, el, adj, *, num_heads, out_feats, negative_slope,
                  use_elu, mean_heads, out_dtype, tq=None, tk=None):
    n = z.shape[0]
    hf = num_heads * out_feats
    tq = min(tq or 256, n)
    tk = min(tk or 512, n)
    assert n % tq == 0 and n % tk == 0
    out_w = out_feats if mean_heads else hf

    kernel = functools.partial(
        _gat_flash_kernel, num_heads=num_heads, out_feats=out_feats,
        negative_slope=negative_slope, use_elu=use_elu, mean_heads=mean_heads)

    return pl.pallas_call(
        kernel,
        out_shape=jax.ShapeDtypeStruct((n, out_w), out_dtype),
        grid_spec=pltpu.PrefetchScalarGridSpec(
            num_scalar_prefetch=0,
            grid=(n // tq, n // tk),
            in_specs=[
                pl.BlockSpec((tq, num_heads), lambda qi, kj: (qi, 0)),  # er
                pl.BlockSpec((num_heads, tk), lambda qi, kj: (0, kj)),  # el
                pl.BlockSpec((tq, tk),        lambda qi, kj: (qi, kj)), # adj
                pl.BlockSpec((tk, hf),        lambda qi, kj: (kj, 0)),  # z
            ],
            out_specs=pl.BlockSpec((tq, out_w), lambda qi, kj: (qi, 0)),
            scratch_shapes=[
                pltpu.VMEM((num_heads, tq, 1), jnp.float32),         # m
                pltpu.VMEM((num_heads, tq, 1), jnp.float32),         # l
                pltpu.VMEM((num_heads, tq, out_feats), jnp.float32), # acc
            ],
        ),
        compiler_params=pltpu.CompilerParams(
            dimension_semantics=("parallel", "arbitrary"),
            vmem_limit_bytes=48 * 1024 * 1024),
    )(er, el, adj, z)


# ----------------------------------------------------------------------------
# One GraphAttnLayer forward (eval mode).
# Returns (N, H*F)  (already the flatten(1) layout), or (N, F) if mean_heads.
# ----------------------------------------------------------------------------
def gat_layer(h, w_fc, attn_l, attn_r, adj, *, num_heads, out_feats,
              negative_slope, use_elu, mean_heads=False,
              out_dtype=jnp.bfloat16, tq=None, tk=None):
    n = h.shape[0]
    # fc projection, stored once in bf16 in the flattened head-major layout.
    z = matmul(h, w_fc, out_dtype=jnp.bfloat16)          # (N, H*F)
    # Per-node score terms (cheap O(N*H*F) einsums, done once per layer so the
    # attention kernel never runs an M=1 matmul per tile).
    z3 = z.reshape(n, num_heads, out_feats).astype(jnp.float32)
    er = jnp.einsum('nhf,hf->nh', z3, attn_r)            # (N, H) dst-side
    el = jnp.einsum('nhf,hf->hn', z3, attn_l)            # (H, N) src-side
    return gat_attention(z, er, el, adj,
                         num_heads=num_heads, out_feats=out_feats,
                         negative_slope=negative_slope, use_elu=use_elu,
                         mean_heads=mean_heads, out_dtype=out_dtype,
                         tq=tq, tk=tk)


# ----------------------------------------------------------------------------
# ProcessedGATWithLoss forward (eval mode, output_attn=False, out_rep=False).
# ----------------------------------------------------------------------------
def processed_gat_forward(params, x, adj, cfg):
    tq, tk = cfg.get("tq"), cfg.get("tk")
    # inputs = self.in_process(inputs)   (Linear, no bias)
    h = matmul(x, params["in_process_w"], out_dtype=jnp.bfloat16)

    # hidden GAT layers: h = layer(g, h).flatten(1)   (layout already flat)
    for l in range(cfg["num_layers"]):
        p = params["layers"][l]
        h = gat_layer(h, p["w_fc"], p["attn_l"], p["attn_r"], adj,
                      num_heads=cfg["heads"][l], out_feats=cfg["num_hidden"],
                      negative_slope=cfg["negative_slope"], use_elu=True,
                      mean_heads=False, out_dtype=jnp.bfloat16, tq=tq, tk=tk)

    # output layer: logits = layer(g, h).mean(1)  (mean fused into the kernel)
    p = params["layers"][-1]
    logits = gat_layer(h, p["w_fc"], p["attn_l"], p["attn_r"], adj,
                       num_heads=cfg["heads"][-1],
                       out_feats=cfg["num_classes"],
                       negative_slope=cfg["negative_slope"], use_elu=False,
                       mean_heads=True, out_dtype=jnp.float32, tq=tq, tk=tk)
    return logits


# ----------------------------------------------------------------------------
# Pure-JAX reference (same bf16 cast points) for a correctness check.
# ----------------------------------------------------------------------------
def reference_forward(params, x, adj, cfg):
    neg = cfg["negative_slope"]
    mask = adj > 0

    def bf16_matmul(a, b):
        return jnp.dot(a.astype(jnp.bfloat16), b.astype(jnp.bfloat16),
                       preferred_element_type=jnp.float32)

    def dense_gat(h, w, al, ar, H, F, use_elu, mean_heads):
        n = h.shape[0]
        z = bf16_matmul(h, w).astype(jnp.bfloat16)
        z3 = z.reshape(n, H, F).astype(jnp.float32)
        er = jnp.einsum('nhf,hf->nh', z3, ar)
        el = jnp.einsum('nhf,hf->nh', z3, al)
        e = er[:, :, None] + jnp.transpose(el)[None, :, :]   # e[i,h,j]
        e = jnp.where(e > 0, e, neg * e)
        e = jnp.where(mask[:, None, :], e, -1e30)
        e = e - jnp.max(e, axis=-1, keepdims=True)
        p = jnp.exp(e)
        alpha = p / jnp.sum(p, axis=-1, keepdims=True)
        out = jnp.einsum('nhj,jhf->nhf', alpha.astype(jnp.bfloat16),
                         z3.astype(jnp.bfloat16),
                         preferred_element_type=jnp.float32)
        if use_elu:
            out = jnp.where(out > 0, out, jnp.expm1(jnp.minimum(out, 0.0)))
        if mean_heads:
            return jnp.mean(out, axis=1)
        return out.reshape(n, H * F)

    h = bf16_matmul(x, params["in_process_w"]).astype(jnp.bfloat16)
    for l in range(cfg["num_layers"]):
        p = params["layers"][l]
        h = dense_gat(h, p["w_fc"], p["attn_l"], p["attn_r"],
                      cfg["heads"][l], cfg["num_hidden"], True, False)
        h = h.astype(jnp.bfloat16)
    p = params["layers"][-1]
    return dense_gat(h, p["w_fc"], p["attn_l"], p["attn_r"],
                     cfg["heads"][-1], cfg["num_classes"], False, True)


# ----------------------------------------------------------------------------
# Parameter init.
# ----------------------------------------------------------------------------
def init_params(key, cfg):
    in_dim = cfg["in_dim"]
    reduced_dim = cfg["reduced_dim"]
    num_hidden = cfg["num_hidden"]
    num_classes = cfg["num_classes"]
    heads = cfg["heads"]
    num_layers = cfg["num_layers"]

    keys = jax.random.split(key, 1 + 3 * (num_layers + 1))
    ki = iter(keys)

    def w(k, shape, fan_in):
        return (jax.random.normal(k, shape, dtype=jnp.float32)
                * (1.0 / jnp.sqrt(jnp.float32(fan_in))))

    params = {"in_process_w": w(next(ki), (in_dim, reduced_dim), in_dim),
              "layers": []}

    layer_in = reduced_dim
    for l in range(num_layers):
        h_l, f_l = heads[l], num_hidden
        params["layers"].append({
            "w_fc": w(next(ki), (layer_in, h_l * f_l), layer_in),
            "attn_l": w(next(ki), (h_l, f_l), f_l),
            "attn_r": w(next(ki), (h_l, f_l), f_l),
        })
        layer_in = h_l * f_l

    h_o, f_o = heads[-1], num_classes
    params["layers"].append({
        "w_fc": w(next(ki), (layer_in, h_o * f_o), layer_in),
        "attn_l": w(next(ki), (h_o, f_o), f_o),
        "attn_r": w(next(ki), (h_o, f_o), f_o),
    })
    return params


if __name__ == "__main__":
    cfg = dict(
        num_layers=1,
        in_dim=128,
        reduced_dim=128,
        num_hidden=128,
        num_classes=8,
        heads=[2, 1],
        negative_slope=0.2,
        feat_drop=0.0,      # eval mode -> identity
        attn_drop=0.0,      # eval mode -> identity
        residual=False,
        reg=0.0,
        reg_last=False,
        # small tiles so the online-softmax (2x2) grid path is exercised
        tq=128,
        tk=128,
    )
    N = 256

    key = jax.random.PRNGKey(0)
    k_params, k_x, k_adj = jax.random.split(key, 3)

    params = init_params(k_params, cfg)

    x = jax.random.normal(k_x, (N, cfg["in_dim"]), dtype=jnp.float32)
    adj_rand = jax.random.uniform(k_adj, (N, N)) < 0.05
    adj = (adj_rand | jnp.eye(N, dtype=bool)).astype(jnp.int8)  # self-loops

    logits = processed_gat_forward(params, x, adj, cfg)
    logits = jax.block_until_ready(logits)

    assert logits.shape == (N, cfg["num_classes"])
    assert bool(jnp.all(jnp.isfinite(logits)))

    ref = jax.block_until_ready(reference_forward(params, x, adj, cfg))
    assert bool(jnp.allclose(logits, ref, rtol=3e-2, atol=3e-2)), (
        float(jnp.max(jnp.abs(logits - ref))))

    print("KERNEL_OK")
</pallas_src>

<mosaic_0001>
module attributes {stable_mosaic.version = 11 : i64} {
  func.func @_matmul_kernel(%arg0: i32, %arg1: i32, %arg2: i32, %arg3: memref<256x128xf32, #tpu.memory_space<vmem>>, %arg4: memref<128x128xf32, #tpu.memory_space<vmem>>, %arg5: memref<256x128xbf16, #tpu.memory_space<vmem>>, %arg6: memref<256x128xf32, #tpu.memory_space<vmem>>) attributes {dimension_semantics = [#tpu.dimension_semantics<parallel>, #tpu.dimension_semantics<parallel>, #tpu.dimension_semantics<arbitrary>], iteration_bounds = array<i64: 1, 1, 1>, scalar_prefetch = 0 : i64, scratch_operands = 1 : i64, tpu.core_type = #tpu.core_type<tc>, window_params = [{transform_indices = @transform_0, window_bounds = array<i64: 256, 128>}, {transform_indices = @transform_1, window_bounds = array<i64: 128, 128>}, {transform_indices = @transform_2, window_bounds = array<i64: 256, 128>}]} {
    %c0_i32 = arith.constant 0 : i32
    %0 = arith.cmpi eq, %arg2, %c0_i32 : i32
    %1 = arith.extui %0 : i1 to i32
    %c0_i32_0 = arith.constant 0 : i32
    %2 = arith.cmpi ne, %1, %c0_i32_0 : i32
    scf.if %2 {
      %cst_10 = arith.constant 0.000000e+00 : f32
      %14 = vector.broadcast %cst_10 : f32 to vector<256x128xf32>
      %c0_11 = arith.constant 0 : index
      %c0_12 = arith.constant 0 : index
      %15 = vector.load %arg6[%c0_11, %c0_12] : memref<256x128xf32, #tpu.memory_space<vmem>>, vector<256x128xf32>
      tpu.vector_store %arg6[%c0_11, %c0_12], %14 {strides = array<i32>} : memref<256x128xf32, #tpu.memory_space<vmem>>, vector<256x128xf32>,
    } else {
    }
    %c0 = arith.constant 0 : index
    %c0_1 = arith.constant 0 : index
    %3 = vector.load %arg6[%c0, %c0_1] : memref<256x128xf32, #tpu.memory_space<vmem>>, vector<256x128xf32>
    %c0_2 = arith.constant 0 : index
    %c0_3 = arith.constant 0 : index
    %4 = vector.load %arg3[%c0_2, %c0_3] : memref<256x128xf32, #tpu.memory_space<vmem>>, vector<256x128xf32>
    %5 = arith.truncf %4 : vector<256x128xf32> to vector<256x128xbf16>
    %c0_4 = arith.constant 0 : index
    %c0_5 = arith.constant 0 : index
    %6 = vector.load %arg4[%c0_4, %c0_5] : memref<128x128xf32, #tpu.memory_space<vmem>>, vector<128x128xf32>
    %7 = arith.truncf %6 : vector<128x128xf32> to vector<128x128xbf16>
    %cst = arith.constant dense<0.000000e+00> : vector<256x128xf32>
    %8 = tpu.matmul %5, %7, %cst {dimension_numbers = #tpu.dot_dimension_numbers<[1], [0], [0], [1], [0, 0, 1, 1], [], []>} : vector<256x128xbf16>, vector<128x128xbf16>, vector<256x128xf32> -> vector<256x128xf32>
    %9 = arith.addf %3, %8 : vector<256x128xf32>
    %c0_6 = arith.constant 0 : index
    %c0_7 = arith.constant 0 : index
    %10 = vector.load %arg6[%c0_6, %c0_7] : memref<256x128xf32, #tpu.memory_space<vmem>>, vector<256x128xf32>
    tpu.vector_store %arg6[%c0_6, %c0_7], %9 {strides = array<i32>} : memref<256x128xf32, #tpu.memory_space<vmem>>, vector<256x128xf32>,
    %c0_i32_8 = arith.constant 0 : i32
    %11 = arith.cmpi eq, %arg2, %c0_i32_8 : i32
    %12 = arith.extui %11 : i1 to i32
    %c0_i32_9 = arith.constant 0 : i32
    %13 = arith.cmpi ne, %12, %c0_i32_9 : i32
    scf.if %13 {
      %c0_10 = arith.constant 0 : index
      %c0_11 = arith.constant 0 : index
      %14 = vector.load %arg6[%c0_10, %c0_11] : memref<256x128xf32, #tpu.memory_space<vmem>>, vector<256x128xf32>
      %15 = arith.truncf %14 : vector<256x128xf32> to vector<256x128xbf16>
      %c0_12 = arith.constant 0 : index
      %c0_13 = arith.constant 0 : index
      %16 = vector.load %arg5[%c0_12, %c0_13] : memref<256x128xbf16, #tpu.memory_space<vmem>>, vector<256x128xbf16>
      tpu.vector_store %arg5[%c0_12, %c0_13], %15 {strides = array<i32>} : memref<256x128xbf16, #tpu.memory_space<vmem>>, vector<256x128xbf16>,
    } else {
    }
    return
  }
  func.func @transform_0(%arg0: i32, %arg1: i32, %arg2: i32) -> (i32, i32) {
    %c0_i32 = arith.constant 0 : i32
    return %arg0, %arg2 : i32, i32
  }
  func.func @transform_1(%arg0: i32, %arg1: i32, %arg2: i32) -> (i32, i32) {
    %c0_i32 = arith.constant 0 : i32
    return %arg2, %arg1 : i32, i32
  }
  func.func @transform_2(%arg0: i32, %arg1: i32, %arg2: i32) -> (i32, i32) {
    %c0_i32 = arith.constant 0 : i32
    return %arg0, %arg1 : i32, i32
  }
}

</mosaic_0001>

<llo_original>
// kernel: tpu_custom_call.1
$region0: #{tpu_custom_call.1}
  #allocation0 [shape = 'u32[]', space=smem, size = 0x4, offset = 0x4, fixed_abs, tag = 'smem constant byte address 0x4 - core index']
  #allocation1 [shape = 'u32[144,128]{1,0:T(1,128)}', space=vmem, size = 0x12000, scoped, tag = 'internal scratch']
  #allocation2 [shape = 'f32[256,128]{1,0:T(8,128)}', space=vmem, size = 0x20000, scoped, tag = 'scratch operand']
  %s0 = inlined_call_operand.hbm [shape: f32[256,128], index: 0, kind: input, shape index: {}]
  %s1 = inlined_call_operand.hbm [shape: f32[128,128], index: 1, kind: input, shape index: {}]
  %s2 = inlined_call_operand.hbm [shape: bf16[256,128], index: 2, kind: output, shape index: {}]
  %s3 = sld [smem:[#allocation0]]
  $region34: #{tpu_custom_call.1} parent=0
    _
  %s5 = ssub.s32 1, %s3
  %s6 = scalar_select 0, %s5, %s3
  $region1: #{tpu_custom_call.1} parent=0
    #allocation3 [shape = 'u8[131072]{0}', space=vmem, size = 0x20000, scoped, tag = 'input window, operand 0, single buffered']
    #allocation4 [shape = 's32[1]{0}', space=sflag, size = 0x4, scoped, tag = 'scoped memory for tpu_custom_call.1']
    #allocation5 [shape = 's32[1]{0}', space=sflag, size = 0x4, scoped, tag = 'scoped memory for tpu_custom_call.1']
    #allocation6 [shape = 'u8[65536]{0}', space=vmem, size = 0x10000, scoped, tag = 'input window, operand 1, single buffered']
    #allocation7 [shape = 's32[1]{0}', space=sflag, size = 0x4, scoped, tag = 'scoped memory for tpu_custom_call.1']
    #allocation8 [shape = 'u8[65536]{0}', space=vmem, size = 0x10000, scoped, tag = 'output window, operand 0, single buffered']
    %7 = vsyncpa [#allocation4], 0
    %8 = vsyncpa [#allocation7], 0
    %9 = vsyncpa [#allocation5], 0
    // Predicated region
    $region2: #{tpu_custom_call.1} parent=1 // pred_check
      _
    $region3: #{tpu_custom_call.1} parent=1 // pred_check_branch
      %11 = sbr.rel (0) target = $region5
    $region4: #{tpu_custom_call.1} parent=1 // pred_region
      %s13 = ssub.s32 4096, 4096
      %14 = vsyncadd [#allocation4], %s13
      %s15 = sshll.u32 [#allocation3], 4
      %s16 = int_to_ptr.vmem [resolvable:$true] %s15
      %21 = dma.hbm_to_vmem [thread:$0]  %s0, 4096, %s16, [#allocation4], 128, 128, 8
    $region5: #{tpu_custom_call.1} parent=1 // pred_fallthru
      _
    // Predicated region
    $region6: #{tpu_custom_call.1} parent=1 // pred_check
      _
    $region7: #{tpu_custom_call.1} parent=1 // pred_check_branch
      %23 = sbr.rel (0) target = $region9
    $region8: #{tpu_custom_call.1} parent=1 // pred_region
      %s25 = ssub.s32 2048, 2048
      %26 = vsyncadd [#allocation7], %s25
      %s27 = sshll.u32 [#allocation6], 4
      %s28 = int_to_ptr.vmem [resolvable:$true] %s27
      %33 = dma.hbm_to_vmem [thread:$0]  %s1, 2048, %s28, [#allocation7], 128, 128, 8
    $region9: #{tpu_custom_call.1} parent=1 // pred_fallthru
      _
    // Predicated region
    $region10: #{tpu_custom_call.1} parent=1 // pred_check
      _
    $region11: #{tpu_custom_call.1} parent=1 // pred_check_branch
      %35 = sbr.rel (0) target = $region13
    $region12: #{tpu_custom_call.1} parent=1 // pred_region
      %36 = dma.done [#allocation4], 4096
    $region13: #{tpu_custom_call.1} parent=1 // pred_fallthru
      _
    // Predicated region
    $region14: #{tpu_custom_call.1} parent=1 // pred_check
      _
    $region15: #{tpu_custom_call.1} parent=1 // pred_check_branch
      %38 = sbr.rel (0) target = $region17
    $region16: #{tpu_custom_call.1} parent=1 // pred_region
      %39 = dma.done [#allocation7], 2048
    $region17: #{tpu_custom_call.1} parent=1 // pred_fallthru
      _
    %p41 = scmp.eq.s32.totalorder 0, 0
    // Predicated region
    $region18: #{tpu_custom_call.1} parent=1 // pred_check
      %p42 = pneg %p41
    $region19: #{tpu_custom_call.1} parent=1 // pred_check_branch
      %44 = sbr.rel (%p42) target = $region21
    $region20: #{tpu_custom_call.1} parent=1 // pred_region
      %45 = vst [vmem:[#allocation2] sm:$0xff] 0.0
      %46 = vst [vmem:[#allocation2 + $0x8] sm:$0xff] 0.0
      %47 = vst [vmem:[#allocation2 + $0x10] sm:$0xff] 0.0
      %48 = vst [vmem:[#allocation2 + $0x18] sm:$0xff] 0.0
      %49 = vst [vmem:[#allocation2 + $0x20] sm:$0xff] 0.0
      %50 = vst [vmem:[#allocation2 + $0x28] sm:$0xff] 0.0
      %51 = vst [vmem:[#allocation2 + $0x30] sm:$0xff] 0.0
      %52 = vst [vmem:[#allocation2 + $0x38] sm:$0xff] 0.0
      %53 = vst [vmem:[#allocation2 + $0x40] sm:$0xff] 0.0
      %54 = vst [vmem:[#allocation2 + $0x48] sm:$0xff] 0.0
      %55 = vst [vmem:[#allocation2 + $0x50] sm:$0xff] 0.0
      %56 = vst [vmem:[#allocation2 + $0x58] sm:$0xff] 0.0
      %57 = vst [vmem:[#allocation2 + $0x60] sm:$0xff] 0.0
      %58 = vst [vmem:[#allocation2 + $0x68] sm:$0xff] 0.0
      %59 = vst [vmem:[#allocation2 + $0x70] sm:$0xff] 0.0
      %60 = vst [vmem:[#allocation2 + $0x78] sm:$0xff] 0.0
      %61 = vst [vmem:[#allocation2 + $0x80] sm:$0xff] 0.0
      %62 = vst [vmem:[#allocation2 + $0x88] sm:$0xff] 0.0
      %63 = vst [vmem:[#allocation2 + $0x90] sm:$0xff] 0.0
      %64 = vst [vmem:[#allocation2 + $0x98] sm:$0xff] 0.0
      %65 = vst [vmem:[#allocation2 + $0xa0] sm:$0xff] 0.0
      %66 = vst [vmem:[#allocation2 + $0xa8] sm:$0xff] 0.0
      %67 = vst [vmem:[#allocation2 + $0xb0] sm:$0xff] 0.0
      %68 = vst [vmem:[#allocation2 + $0xb8] sm:$0xff] 0.0
      %69 = vst [vmem:[#allocation2 + $0xc0] sm:$0xff] 0.0
      %70 = vst [vmem:[#allocation2 + $0xc8] sm:$0xff] 0.0
      %71 = vst [vmem:[#allocation2 + $0xd0] sm:$0xff] 0.0
      %72 = vst [vmem:[#allocation2 + $0xd8] sm:$0xff] 0.0
      %73 = vst [vmem:[#allocation2 + $0xe0] sm:$0xff] 0.0
      %74 = vst [vmem:[#allocation2 + $0xe8] sm:$0xff] 0.0
      %75 = vst [vmem:[#allocation2 + $0xf0] sm:$0xff] 0.0
      %76 = vst [vmem:[#allocation2 + $0xf8] sm:$0xff] 0.0
    $region21: #{tpu_custom_call.1} parent=1 // pred_fallthru
      _
    %v77 = vld [vmem:[#allocation2] sm:$0xff]
    %v78 = vld [vmem:[#allocation2 + $0x8] sm:$0xff]
    %v79 = vld [vmem:[#allocation2 + $0x10] sm:$0xff]
    %v80 = vld [vmem:[#allocation2 + $0x18] sm:$0xff]
    %v81 = vld [vmem:[#allocation2 + $0x20] sm:$0xff]
    %v82 = vld [vmem:[#allocation2 + $0x28] sm:$0xff]
    %v83 = vld [vmem:[#allocation2 + $0x30] sm:$0xff]
    %v84 = vld [vmem:[#allocation2 + $0x38] sm:$0xff]
    %v85 = vld [vmem:[#allocation2 + $0x40] sm:$0xff]
    %v86 = vld [vmem:[#allocation2 + $0x48] sm:$0xff]
    %v87 = vld [vmem:[#allocation2 + $0x50] sm:$0xff]
    %v88 = vld [vmem:[#allocation2 + $0x58] sm:$0xff]
    %v89 = vld [vmem:[#allocation2 + $0x60] sm:$0xff]
    %v90 = vld [vmem:[#allocation2 + $0x68] sm:$0xff]
    %v91 = vld [vmem:[#allocation2 + $0x70] sm:$0xff]
    %v92 = vld [vmem:[#allocation2 + $0x78] sm:$0xff]
    %v93 = vld [vmem:[#allocation2 + $0x80] sm:$0xff]
    %v94 = vld [vmem:[#allocation2 + $0x88] sm:$0xff]
    %v95 = vld [vmem:[#allocation2 + $0x90] sm:$0xff]
    %v96 = vld [vmem:[#allocation2 + $0x98] sm:$0xff]
    %v97 = vld [vmem:[#allocation2 + $0xa0] sm:$0xff]
    %v98 = vld [vmem:[#allocation2 + $0xa8] sm:$0xff]
    %v99 = vld [vmem:[#allocation2 + $0xb0] sm:$0xff]
    %v100 = vld [vmem:[#allocation2 + $0xb8] sm:$0xff]
    %v101 = vld [vmem:[#allocation2 + $0xc0] sm:$0xff]
    %v102 = vld [vmem:[#allocation2 + $0xc8] sm:$0xff]
    %v103 = vld [vmem:[#allocation2 + $0xd0] sm:$0xff]
    %v104 = vld [vmem:[#allocation2 + $0xd8] sm:$0xff]
    %v105 = vld [vmem:[#allocation2 + $0xe0] sm:$0xff]
    %v106 = vld [vmem:[#allocation2 + $0xe8] sm:$0xff]
    %v107 = vld [vmem:[#allocation2 + $0xf0] sm:$0xff]
    %v108 = vld [vmem:[#allocation2 + $0xf8] sm:$0xff]
    %v109 = vld [vmem:[#allocation3] sm:$0xff]
    %v110 = vld [vmem:[#allocation3 + $0x8] sm:$0xff]
    %v111 = vld [vmem:[#allocation3 + $0x10] sm:$0xff]
    %v112 = vld [vmem:[#allocation3 + $0x18] sm:$0xff]
    %v113 = vld [vmem:[#allocation3 + $0x20] sm:$0xff]
    %v114 = vld [vmem:[#allocation3 + $0x28] sm:$0xff]
    %v115 = vld [vmem:[#allocation3 + $0x30] sm:$0xff]
    %v116 = vld [vmem:[#allocation3 + $0x38] sm:$0xff]
    %v117 = vld [vmem:[#allocation3 + $0x40] sm:$0xff]
    %v118 = vld [vmem:[#allocation3 + $0x48] sm:$0xff]
    %v119 = vld [vmem:[#allocation3 + $0x50] sm:$0xff]
    %v120 = vld [vmem:[#allocation3 + $0x58] sm:$0xff]
    %v121 = vld [vmem:[#allocation3 + $0x60] sm:$0xff]
    %v122 = vld [vmem:[#allocation3 + $0x68] sm:$0xff]
    %v123 = vld [vmem:[#allocation3 + $0x70] sm:$0xff]
    %v124 = vld [vmem:[#allocation3 + $0x78] sm:$0xff]
    %v125 = vld [vmem:[#allocation3 + $0x80] sm:$0xff]
    %v126 = vld [vmem:[#allocation3 + $0x88] sm:$0xff]
    %v127 = vld [vmem:[#allocation3 + $0x90] sm:$0xff]
    %v128 = vld [vmem:[#allocation3 + $0x98] sm:$0xff]
    %v129 = vld [vmem:[#allocation3 + $0xa0] sm:$0xff]
    %v130 = vld [vmem:[#allocation3 + $0xa8] sm:$0xff]
    %v131 = vld [vmem:[#allocation3 + $0xb0] sm:$0xff]
    %v132 = vld [vmem:[#allocation3 + $0xb8] sm:$0xff]
    %v133 = vld [vmem:[#allocation3 + $0xc0] sm:$0xff]
    %v134 = vld [vmem:[#allocation3 + $0xc8] sm:$0xff]
    %v135 = vld [vmem:[#allocation3 + $0xd0] sm:$0xff]
    %v136 = vld [vmem:[#allocation3 + $0xd8] sm:$0xff]
    %v137 = vld [vmem:[#allocation3 + $0xe0] sm:$0xff]
    %v138 = vld [vmem:[#allocation3 + $0xe8] sm:$0xff]
    %v139 = vld [vmem:[#allocation3 + $0xf0] sm:$0xff]
    %v140 = vld [vmem:[#allocation3 + $0xf8] sm:$0xff]
    %v141 = vpack.c.bf16 %v110, %v109
    %v142 = vpack.c.bf16 %v112, %v111
    %v143 = vpack.c.bf16 %v114, %v113
    %v144 = vpack.c.bf16 %v116, %v115
    %v145 = vpack.c.bf16 %v118, %v117
    %v146 = vpack.c.bf16 %v120, %v119
    %v147 = vpack.c.bf16 %v122, %v121
    %v148 = vpack.c.bf16 %v124, %v123
    %v149 = vpack.c.bf16 %v126, %v125
    %v150 = vpack.c.bf16 %v128, %v127
    %v151 = vpack.c.bf16 %v130, %v129
    %v152 = vpack.c.bf16 %v132, %v131
    %v153 = vpack.c.bf16 %v134, %v133
    %v154 = vpack.c.bf16 %v136, %v135
    %v155 = vpack.c.bf16 %v138, %v137
    %v156 = vpack.c.bf16 %v140, %v139
    %v157 = vld [vmem:[#allocation6] sm:$0xff]
    %v158 = vld [vmem:[#allocation6 + $0x8] sm:$0xff]
    %v159 = vld [vmem:[#allocation6 + $0x10] sm:$0xff]
    %v160 = vld [vmem:[#allocation6 + $0x18] sm:$0xff]
    %v161 = vld [vmem:[#allocation6 + $0x20] sm:$0xff]
    %v162 = vld [vmem:[#allocation6 + $0x28] sm:$0xff]
    %v163 = vld [vmem:[#allocation6 + $0x30] sm:$0xff]
    %v164 = vld [vmem:[#allocation6 + $0x38] sm:$0xff]
    %v165 = vld [vmem:[#allocation6 + $0x40] sm:$0xff]
    %v166 = vld [vmem:[#allocation6 + $0x48] sm:$0xff]
    %v167 = vld [vmem:[#allocation6 + $0x50] sm:$0xff]
    %v168 = vld [vmem:[#allocation6 + $0x58] sm:$0xff]
    %v169 = vld [vmem:[#allocation6 + $0x60] sm:$0xff]
    %v170 = vld [vmem:[#allocation6 + $0x68] sm:$0xff]
    %v171 = vld [vmem:[#allocation6 + $0x70] sm:$0xff]
    %v172 = vld [vmem:[#allocation6 + $0x78] sm:$0xff]
    %v173 = vpack.c.bf16 %v158, %v157
    %v174 = vpack.c.bf16 %v160, %v159
    %v175 = vpack.c.bf16 %v162, %v161
    %v176 = vpack.c.bf16 %v164, %v163
    %v177 = vpack.c.bf16 %v166, %v165
    %v178 = vpack.c.bf16 %v168, %v167
    %v179 = vpack.c.bf16 %v170, %v169
    %v180 = vpack.c.bf16 %v172, %v171
    %181 = vmatprep.subr.bf16.mxu0 0
    %182 = vmatpush1.bf16.msra.mxu0 %v180
    %183 = vmatprep.subr.bf16.mxu0 0
    %184 = vmatpush1.bf16.msra.mxu0 %v179
    %185 = vmatprep.subr.bf16.mxu0 0
    %186 = vmatpush1.bf16.msra.mxu0 %v178
    %187 = vmatprep.subr.bf16.mxu0 0
    %188 = vmatpush1.bf16.msra.mxu0 %v177
    %189 = vmatprep.subr.bf16.mxu0 0
    %190 = vmatpush1.bf16.msra.mxu0 %v176
    %191 = vmatprep.subr.bf16.mxu0 0
    %192 = vmatpush1.bf16.msra.mxu0 %v175
    %193 = vmatprep.subr.bf16.mxu0 0
    %194 = vmatpush1.bf16.msra.mxu0 %v174
    %195 = vmatprep.subr.bf16.mxu0 0
    %196 = vmatpush1.bf16.msra.mxu0 %v173
    %197 = vmatprep.subr.bf16.mxu0 0
    %198 = vmatpush2.bf16.msra.mxu0 0
    %199 = vmatprep.subr.bf16.mxu0 0
    %200 = vmatpush2.bf16.msra.mxu0 0
    %201 = vmatprep.subr.bf16.mxu0 0
    %202 = vmatpush2.bf16.msra.mxu0 0
    %203 = vmatprep.subr.bf16.mxu0 0
    %204 = vmatpush2.bf16.msra.mxu0 0
    %205 = vmatprep.subr.bf16.mxu0 0
    %206 = vmatpush2.bf16.msra.mxu0 0
    %207 = vmatprep.subr.bf16.mxu0 0
    %208 = vmatpush2.bf16.msra.mxu0 0
    %209 = vmatprep.subr.bf16.mxu0 0
    %210 = vmatpush2.bf16.msra.mxu0 0
    %211 = vmatprep.subr.bf16.mxu0 0
    %212 = vmatpush2.bf16.msra.mxu0 0
    %213 = vmatprep.mubr.bf16.mxu0 0
    %214 = vmatmul.mubr.bf16.gmra.mxu0 %v141
    %v215 = vpop.f32.mrf.mxu0
    %v216 = vadd.f32 0.0, %v215
    %v217 = vpop.f32.mrf.mxu0
    %v218 = vpop.f32.mrf.mxu0
    %v219 = vadd.f32 0.0, %v218
    %v220 = vpop.f32.mrf.mxu0
    %221 = vmatprep.mubr.bf16.mxu0 0
    %222 = vmatmul.mubr.bf16.gmra.mxu0 %v142
    %v223 = vpop.f32.mrf.mxu0
    %v224 = vadd.f32 0.0, %v223
    %v225 = vpop.f32.mrf.mxu0
    %v226 = vpop.f32.mrf.mxu0
    %v227 = vadd.f32 0.0, %v226
    %v228 = vpop.f32.mrf.mxu0
    %229 = vmatprep.mubr.bf16.mxu0 0
    %230 = vmatmul.mubr.bf16.gmra.mxu0 %v143
    %v231 = vpop.f32.mrf.mxu0
    %v232 = vadd.f32 0.0, %v231
    %v233 = vpop.f32.mrf.mxu0
    %v234 = vpop.f32.mrf.mxu0
    %v235 = vadd.f32 0.0, %v234
    %v236 = vpop.f32.mrf.mxu0
    %237 = vmatprep.mubr.bf16.mxu0 0
    %238 = vmatmul.mubr.bf16.gmra.mxu0 %v144
    %v239 = vpop.f32.mrf.mxu0
    %v240 = vadd.f32 0.0, %v239
    %v241 = vpop.f32.mrf.mxu0
    %v242 = vpop.f32.mrf.mxu0
    %v243 = vadd.f32 0.0, %v242
    %v244 = vpop.f32.mrf.mxu0
    %245 = vmatprep.mubr.bf16.mxu0 0
    %246 = vmatmul.mubr.bf16.gmra.mxu0 %v145
    %v247 = vpop.f32.mrf.mxu0
    %v248 = vadd.f32 0.0, %v247
    %v249 = vpop.f32.mrf.mxu0
    %v250 = vpop.f32.mrf.mxu0
    %v251 = vadd.f32 0.0, %v250
    %v252 = vpop.f32.mrf.mxu0
    %253 = vmatprep.mubr.bf16.mxu0 0
    %254 = vmatmul.mubr.bf16.gmra.mxu0 %v146
    %v255 = vpop.f32.mrf.mxu0
    %v256 = vadd.f32 0.0, %v255
    %v257 = vpop.f32.mrf.mxu0
    %v258 = vpop.f32.mrf.mxu0
    %v259 = vadd.f32 0.0, %v258
    %v260 = vpop.f32.mrf.mxu0
    %261 = vmatprep.mubr.bf16.mxu0 0
    %262 = vmatmul.mubr.bf16.gmra.mxu0 %v147
    %v263 = vpop.f32.mrf.mxu0
    %v264 = vadd.f32 0.0, %v263
    %v265 = vpop.f32.mrf.mxu0
    %v266 = vpop.f32.mrf.mxu0
    %v267 = vadd.f32 0.0, %v266
    %v268 = vpop.f32.mrf.mxu0
    %269 = vmatprep.mubr.bf16.mxu0 0
    %270 = vmatmul.mubr.bf16.gmra.mxu0 %v148
    %v271 = vpop.f32.mrf.mxu0
    %v272 = vadd.f32 0.0, %v271
    %v273 = vpop.f32.mrf.mxu0
    %v274 = vpop.f32.mrf.mxu0
    %v275 = vadd.f32 0.0, %v274
    %v276 = vpop.f32.mrf.mxu0
    %277 = vmatprep.mubr.bf16.mxu0 0
    %278 = vmatmul.mubr.bf16.gmra.mxu0 %v149
    %v279 = vpop.f32.mrf.mxu0
    %v280 = vadd.f32 0.0, %v279
    %v281 = vpop.f32.mrf.mxu0
    %v282 = vpop.f32.mrf.mxu0
    %v283 = vadd.f32 0.0, %v282
    %v284 = vpop.f32.mrf.mxu0
    %285 = vmatprep.mubr.bf16.mxu0 0
    %286 = vmatmul.mubr.bf16.gmra.mxu0 %v150
    %v287 = vpop.f32.mrf.mxu0
    %v288 = vadd.f32 0.0, %v287
    %v289 = vpop.f32.mrf.mxu0
    %v290 = vpop.f32.mrf.mxu0
    %v291 = vadd.f32 0.0, %v290
    %v292 = vpop.f32.mrf.mxu0
    %293 = vmatprep.mubr.bf16.mxu0 0
    %294 = vmatmul.mubr.bf16.gmra.mxu0 %v151
    %v295 = vpop.f32.mrf.mxu0
    %v296 = vadd.f32 0.0, %v295
    %v297 = vpop.f32.mrf.mxu0
    %v298 = vpop.f32.mrf.mxu0
    %v299 = vadd.f32 0.0, %v298
    %v300 = vpop.f32.mrf.mxu0
    %301 = vmatprep.mubr.bf16.mxu0 0
    %302 = vmatmul.mubr.bf16.gmra.mxu0 %v152
    %v303 = vpop.f32.mrf.mxu0
    %v304 = vadd.f32 0.0, %v303
    %v305 = vpop.f32.mrf.mxu0
    %v306 = vpop.f32.mrf.mxu0
    %v307 = vadd.f32 0.0, %v306
    %v308 = vpop.f32.mrf.mxu0
    %309 = vmatprep.mubr.bf16.mxu0 0
    %310 = vmatmul.mubr.bf16.gmra.mxu0 %v153
    %v311 = vpop.f32.mrf.mxu0
    %v312 = vadd.f32 0.0, %v311
    %v313 = vpop.f32.mrf.mxu0
    %v314 = vpop.f32.mrf.mxu0
    %v315 = vadd.f32 0.0, %v314
    %v316 = vpop.f32.mrf.mxu0
    %317 = vmatprep.mubr.bf16.mxu0 0
    %318 = vmatmul.mubr.bf16.gmra.mxu0 %v154
    %v319 = vpop.f32.mrf.mxu0
    %v320 = vadd.f32 0.0, %v319
    %v321 = vpop.f32.mrf.mxu0
    %v322 = vpop.f32.mrf.mxu0
    %v323 = vadd.f32 0.0, %v322
    %v324 = vpop.f32.mrf.mxu0
    %325 = vmatprep.mubr.bf16.mxu0 0
    %326 = vmatmul.mubr.bf16.gmra.mxu0 %v155
    %v327 = vpop.f32.mrf.mxu0
    %v328 = vadd.f32 0.0, %v327
    %v329 = vpop.f32.mrf.mxu0
    %v330 = vpop.f32.mrf.mxu0
    %v331 = vadd.f32 0.0, %v330
    %v332 = vpop.f32.mrf.mxu0
    %333 = vmatprep.mubr.bf16.mxu0 0
    %334 = vmatmul.mubr.bf16.gmra.mxu0 %v156
    %v335 = vpop.f32.mrf.mxu0
    %v336 = vadd.f32 0.0, %v335
    %v337 = vpop.f32.mrf.mxu0
    %v338 = vpop.f32.mrf.mxu0
    %v339 = vadd.f32 0.0, %v338
    %v340 = vpop.f32.mrf.mxu0
    %341 = vdwg.mxu0
    %v342 = vadd.f32 %v77, %v216
    %v343 = vadd.f32 %v78, %v219
    %v344 = vadd.f32 %v79, %v224
    %v345 = vadd.f32 %v80, %v227
    %v346 = vadd.f32 %v81, %v232
    %v347 = vadd.f32 %v82, %v235
    %v348 = vadd.f32 %v83, %v240
    %v349 = vadd.f32 %v84, %v243
    %v350 = vadd.f32 %v85, %v248
    %v351 = vadd.f32 %v86, %v251
    %v352 = vadd.f32 %v87, %v256
    %v353 = vadd.f32 %v88, %v259
    %v354 = vadd.f32 %v89, %v264
    %v355 = vadd.f32 %v90, %v267
    %v356 = vadd.f32 %v91, %v272
    %v357 = vadd.f32 %v92, %v275
    %v358 = vadd.f32 %v93, %v280
    %v359 = vadd.f32 %v94, %v283
    %v360 = vadd.f32 %v95, %v288
    %v361 = vadd.f32 %v96, %v291
    %v362 = vadd.f32 %v97, %v296
    %v363 = vadd.f32 %v98, %v299
    %v364 = vadd.f32 %v99, %v304
    %v365 = vadd.f32 %v100, %v307
    %v366 = vadd.f32 %v101, %v312
    %v367 = vadd.f32 %v102, %v315
    %v368 = vadd.f32 %v103, %v320
    %v369 = vadd.f32 %v104, %v323
    %v370 = vadd.f32 %v105, %v328
    %v371 = vadd.f32 %v106, %v331
    %v372 = vadd.f32 %v107, %v336
    %v373 = vadd.f32 %v108, %v339
    %374 = vst [vmem:[#allocation2] sm:$0xff] %v342
    %375 = vst [vmem:[#allocation2 + $0x8] sm:$0xff] %v343
    %376 = vst [vmem:[#allocation2 + $0x10] sm:$0xff] %v344
    %377 = vst [vmem:[#allocation2 + $0x18] sm:$0xff] %v345
    %378 = vst [vmem:[#allocation2 + $0x20] sm:$0xff] %v346
    %379 = vst [vmem:[#allocation2 + $0x28] sm:$0xff] %v347
    %380 = vst [vmem:[#allocation2 + $0x30] sm:$0xff] %v348
    %381 = vst [vmem:[#allocation2 + $0x38] sm:$0xff] %v349
    %382 = vst [vmem:[#allocation2 + $0x40] sm:$0xff] %v350
    %383 = vst [vmem:[#allocation2 + $0x48] sm:$0xff] %v351
    %384 = vst [vmem:[#allocation2 + $0x50] sm:$0xff] %v352
    %385 = vst [vmem:[#allocation2 + $0x58] sm:$0xff] %v353
    %386 = vst [vmem:[#allocation2 + $0x60] sm:$0xff] %v354
    %387 = vst [vmem:[#allocation2 + $0x68] sm:$0xff] %v355
    %388 = vst [vmem:[#allocation2 + $0x70] sm:$0xff] %v356
    %389 = vst [vmem:[#allocation2 + $0x78] sm:$0xff] %v357
    %390 = vst [vmem:[#allocation2 + $0x80] sm:$0xff] %v358
    %391 = vst [vmem:[#allocation2 + $0x88] sm:$0xff] %v359
    %392 = vst [vmem:[#allocation2 + $0x90] sm:$0xff] %v360
    %393 = vst [vmem:[#allocation2 + $0x98] sm:$0xff] %v361
    %394 = vst [vmem:[#allocation2 + $0xa0] sm:$0xff] %v362
    %395 = vst [vmem:[#allocation2 + $0xa8] sm:$0xff] %v363
    %396 = vst [vmem:[#allocation2 + $0xb0] sm:$0xff] %v364
    %397 = vst [vmem:[#allocation2 + $0xb8] sm:$0xff] %v365
    %398 = vst [vmem:[#allocation2 + $0xc0] sm:$0xff] %v366
    %399 = vst [vmem:[#allocation2 + $0xc8] sm:$0xff] %v367
    %400 = vst [vmem:[#allocation2 + $0xd0] sm:$0xff] %v368
    %401 = vst [vmem:[#allocation2 + $0xd8] sm:$0xff] %v369
    %402 = vst [vmem:[#allocation2 + $0xe0] sm:$0xff] %v370
    %403 = vst [vmem:[#allocation2 + $0xe8] sm:$0xff] %v371
    %404 = vst [vmem:[#allocation2 + $0xf0] sm:$0xff] %v372
    %405 = vst [vmem:[#allocation2 + $0xf8] sm:$0xff] %v373
    // Predicated region
    $region22: #{tpu_custom_call.1} parent=1 // pred_check
      %p406 = pneg %p41
    $region23: #{tpu_custom_call.1} parent=1 // pred_check_branch
      %408 = sbr.rel (%p406) target = $region25
    $region24: #{tpu_custom_call.1} parent=1 // pred_region
      %v409 = vld [vmem:[#allocation2] sm:$0xff]
      %v410 = vld [vmem:[#allocation2 + $0x8] sm:$0xff]
      %v411 = vld [vmem:[#allocation2 + $0x10] sm:$0xff]
      %v412 = vld [vmem:[#allocation2 + $0x18] sm:$0xff]
      %v413 = vld [vmem:[#allocation2 + $0x20] sm:$0xff]
      %v414 = vld [vmem:[#allocation2 + $0x28] sm:$0xff]
      %v415 = vld [vmem:[#allocation2 + $0x30] sm:$0xff]
      %v416 = vld [vmem:[#allocation2 + $0x38] sm:$0xff]
      %v417 = vld [vmem:[#allocation2 + $0x40] sm:$0xff]
      %v418 = vld [vmem:[#allocation2 + $0x48] sm:$0xff]
      %v419 = vld [vmem:[#allocation2 + $0x50] sm:$0xff]
      %v420 = vld [vmem:[#allocation2 + $0x58] sm:$0xff]
      %v421 = vld [vmem:[#allocation2 + $0x60] sm:$0xff]
      %v422 = vld [vmem:[#allocation2 + $0x68] sm:$0xff]
      %v423 = vld [vmem:[#allocation2 + $0x70] sm:$0xff]
      %v424 = vld [vmem:[#allocation2 + $0x78] sm:$0xff]
      %v425 = vld [vmem:[#allocation2 + $0x80] sm:$0xff]
      %v426 = vld [vmem:[#allocation2 + $0x88] sm:$0xff]
      %v427 = vld [vmem:[#allocation2 + $0x90] sm:$0xff]
      %v428 = vld [vmem:[#allocation2 + $0x98] sm:$0xff]
      %v429 = vld [vmem:[#allocation2 + $0xa0] sm:$0xff]
      %v430 = vld [vmem:[#allocation2 + $0xa8] sm:$0xff]
      %v431 = vld [vmem:[#allocation2 + $0xb0] sm:$0xff]
      %v432 = vld [vmem:[#allocation2 + $0xb8] sm:$0xff]
      %v433 = vld [vmem:[#allocation2 + $0xc0] sm:$0xff]
      %v434 = vld [vmem:[#allocation2 + $0xc8] sm:$0xff]
      %v435 = vld [vmem:[#allocation2 + $0xd0] sm:$0xff]
      %v436 = vld [vmem:[#allocation2 + $0xd8] sm:$0xff]
      %v437 = vld [vmem:[#allocation2 + $0xe0] sm:$0xff]
      %v438 = vld [vmem:[#allocation2 + $0xe8] sm:$0xff]
      %v439 = vld [vmem:[#allocation2 + $0xf0] sm:$0xff]
      %v440 = vld [vmem:[#allocation2 + $0xf8] sm:$0xff]
      %v441 = vpack.c.bf16 %v410, %v409
      %v442 = vpack.c.bf16 %v412, %v411
      %v443 = vpack.c.bf16 %v414, %v413
      %v444 = vpack.c.bf16 %v416, %v415
      %v445 = vpack.c.bf16 %v418, %v417
      %v446 = vpack.c.bf16 %v420, %v419
      %v447 = vpack.c.bf16 %v422, %v421
      %v448 = vpack.c.bf16 %v424, %v423
      %v449 = vpack.c.bf16 %v426, %v425
      %v450 = vpack.c.bf16 %v428, %v427
      %v451 = vpack.c.bf16 %v430, %v429
      %v452 = vpack.c.bf16 %v432, %v431
      %v453 = vpack.c.bf16 %v434, %v433
      %v454 = vpack.c.bf16 %v436, %v435
      %v455 = vpack.c.bf16 %v438, %v437
      %v456 = vpack.c.bf16 %v440, %v439
      %v473 = vunpack.c.l.b16 %v441
      %v474 = vunpack.c.h.b16 %v441
      %v475 = vunpack.c.l.b16 %v442
      %v476 = vunpack.c.h.b16 %v442
      %v477 = vunpack.c.l.b16 %v443
      %v478 = vunpack.c.h.b16 %v443
      %v479 = vunpack.c.l.b16 %v444
      %v480 = vunpack.c.h.b16 %v444
      %v481 = vunpack.c.l.b16 %v445
      %v482 = vunpack.c.h.b16 %v445
      %v483 = vunpack.c.l.b16 %v446
      %v484 = vunpack.c.h.b16 %v446
      %v485 = vunpack.c.l.b16 %v447
      %v486 = vunpack.c.h.b16 %v447
      %v487 = vunpack.c.l.b16 %v448
      %v488 = vunpack.c.h.b16 %v448
      %v489 = vunpack.c.l.b16 %v449
      %v490 = vunpack.c.h.b16 %v449
      %v491 = vunpack.c.l.b16 %v450
      %v492 = vunpack.c.h.b16 %v450
      %v493 = vunpack.c.l.b16 %v451
      %v494 = vunpack.c.h.b16 %v451
      %v495 = vunpack.c.l.b16 %v452
      %v496 = vunpack.c.h.b16 %v452
      %v497 = vunpack.c.l.b16 %v453
      %v498 = vunpack.c.h.b16 %v453
      %v499 = vunpack.c.l.b16 %v454
      %v500 = vunpack.c.h.b16 %v454
      %v501 = vunpack.c.l.b16 %v455
      %v502 = vunpack.c.h.b16 %v455
      %v503 = vunpack.c.l.b16 %v456
      %v504 = vunpack.c.h.b16 %v456
      %v505 = vpack.c.b16 %v473, %v473
      %v506 = vpack.c.b16 %v474, %v474
      %v507 = vpack.c.b16 %v475, %v475
      %v508 = vpack.c.b16 %v476, %v476
      %v509 = vpack.c.b16 %v477, %v477
      %v510 = vpack.c.b16 %v478, %v478
      %v511 = vpack.c.b16 %v479, %v479
      %v512 = vpack.c.b16 %v480, %v480
      %v513 = vpack.c.b16 %v481, %v481
      %v514 = vpack.c.b16 %v482, %v482
      %v515 = vpack.c.b16 %v483, %v483
      %v516 = vpack.c.b16 %v484, %v484
      %v517 = vpack.c.b16 %v485, %v485
      %v518 = vpack.c.b16 %v486, %v486
      %v519 = vpack.c.b16 %v487, %v487
      %v520 = vpack.c.b16 %v488, %v488
      %v521 = vpack.c.b16 %v489, %v489
      %v522 = vpack.c.b16 %v490, %v490
      %v523 = vpack.c.b16 %v491, %v491
      %v524 = vpack.c.b16 %v492, %v492
      %v525 = vpack.c.b16 %v493, %v493
      %v526 = vpack.c.b16 %v494, %v494
      %v527 = vpack.c.b16 %v495, %v495
      %v528 = vpack.c.b16 %v496, %v496
      %v529 = vpack.c.b16 %v497, %v497
      %v530 = vpack.c.b16 %v498, %v498
      %v531 = vpack.c.b16 %v499, %v499
      %v532 = vpack.c.b16 %v500, %v500
      %v533 = vpack.c.b16 %v501, %v501
      %v534 = vpack.c.b16 %v502, %v502
      %v535 = vpack.c.b16 %v503, %v503
      %v536 = vpack.c.b16 %v504, %v504
      %569 = vst [vmem:[#allocation8] sm:$0xf] %v505
      %570 = vst [vmem:[#allocation8 + $0x4] sm:$0xf] %v506
      %571 = vst [vmem:[#allocation8 + $0x8] sm:$0xf] %v507
      %572 = vst [vmem:[#allocation8 + $0xc] sm:$0xf] %v508
      %573 = vst [vmem:[#allocation8 + $0x10] sm:$0xf] %v509
      %574 = vst [vmem:[#allocation8 + $0x14] sm:$0xf] %v510
      %575 = vst [vmem:[#allocation8 + $0x18] sm:$0xf] %v511
      %576 = vst [vmem:[#allocation8 + $0x1c] sm:$0xf] %v512
      %577 = vst [vmem:[#allocation8 + $0x20] sm:$0xf] %v513
      %578 = vst [vmem:[#allocation8 + $0x24] sm:$0xf] %v514
      %579 = vst [vmem:[#allocation8 + $0x28] sm:$0xf] %v515
      %580 = vst [vmem:[#allocation8 + $0x2c] sm:$0xf] %v516
      %581 = vst [vmem:[#allocation8 + $0x30] sm:$0xf] %v517
      %582 = vst [vmem:[#allocation8 + $0x34] sm:$0xf] %v518
      %583 = vst [vmem:[#allocation8 + $0x38] sm:$0xf] %v519
      %584 = vst [vmem:[#allocation8 + $0x3c] sm:$0xf] %v520
      %585 = vst [vmem:[#allocation8 + $0x40] sm:$0xf] %v521
      %586 = vst [vmem:[#allocation8 + $0x44] sm:$0xf] %v522
      %587 = vst [vmem:[#allocation8 + $0x48] sm:$0xf] %v523
      %588 = vst [vmem:[#allocation8 + $0x4c] sm:$0xf] %v524
      %589 = vst [vmem:[#allocation8 + $0x50] sm:$0xf] %v525
      %590 = vst [vmem:[#allocation8 + $0x54] sm:$0xf] %v526
      %591 = vst [vmem:[#allocation8 + $0x58] sm:$0xf] %v527
      %592 = vst [vmem:[#allocation8 + $0x5c] sm:$0xf] %v528
      %593 = vst [vmem:[#allocation8 + $0x60] sm:$0xf] %v529
      %594 = vst [vmem:[#allocation8 + $0x64] sm:$0xf] %v530
      %595 = vst [vmem:[#allocation8 + $0x68] sm:$0xf] %v531
      %596 = vst [vmem:[#allocation8 + $0x6c] sm:$0xf] %v532
      %597 = vst [vmem:[#allocation8 + $0x70] sm:$0xf] %v533
      %598 = vst [vmem:[#allocation8 + $0x74] sm:$0xf] %v534
      %599 = vst [vmem:[#allocation8 + $0x78] sm:$0xf] %v535
      %600 = vst [vmem:[#allocation8 + $0x7c] sm:$0xf] %v536
    $region25: #{tpu_custom_call.1} parent=1 // pred_fallthru
      _
    // Predicated region
    $region26: #{tpu_custom_call.1} parent=1 // pred_check
      _
    $region27: #{tpu_custom_call.1} parent=1 // pred_check_branch
      %602 = sbr.rel (0) target = $region29
    $region28: #{tpu_custom_call.1} parent=1 // pred_region
      %s604 = ssub.s32 2048, 2048
      %605 = vsyncadd [#allocation5], %s604
      %s606 = sshll.u32 [#allocation8], 4
      %s607 = int_to_ptr.vmem [resolvable:$true] %s606
      %612 = dma.vmem_to_hbm [thread:$0]  %s607, 2048, %s2, [#allocation5], 64, 64, 4
    $region29: #{tpu_custom_call.1} parent=1 // pred_fallthru
      _
    // Predicated region
    $region30: #{tpu_custom_call.1} parent=1 // pred_check
      _
    $region31: #{tpu_custom_call.1} parent=1 // pred_check_branch
      %614 = sbr.rel (0) target = $region33
    $region32: #{tpu_custom_call.1} parent=1 // pred_region
      %615 = dma.done [#allocation5], 2048
    $region33: #{tpu_custom_call.1} parent=1 // pred_fallthru
      _
    %616 = vsyncpa [#allocation4], 1
    %617 = vsyncpa [#allocation7], 1
    %618 = vsyncpa [#allocation5], 1

</llo_original>
